<compile_context>
chip_gen: v5e
topology: v5e:2x2
jax: 0.10.0
libtpu: 0.0.40
codegen_flags: <defaults>
</compile_context>

<pallas_src>
import jax
import jax.numpy as jnp
from jax.experimental import pallas as pl
from jax.experimental.pallas import tpu as pltpu


def _entity_pool_kernel(tok_ref, mask_ref, out_ref, acc_ref, cnt_ref):
    """One (batch-tile, seq-tile) grid step of masked mean pooling.

    tok_ref : (TB, TS, H) input tile (VMEM)
    mask_ref: (TB, TS)    input tile (VMEM)
    out_ref : (TB, H)     output tile, resident across the S axis
    acc_ref : (TB, H)     f32 scratch accumulator (masked sum)
    cnt_ref : (TB, 1)     f32 scratch accumulator (mask count)
    """
    s_idx = pl.program_id(1)

    @pl.when(s_idx == 0)
    def _init():
        acc_ref[...] = jnp.zeros_like(acc_ref)
        cnt_ref[...] = jnp.zeros_like(cnt_ref)

    # Accumulate in float32 regardless of input dtype (cast once per tile so
    # v5e's f32-only VALU is not hit with repeated implicit converts).
    tok = tok_ref[...].astype(jnp.float32)             # (TB, TS, H)
    mask = mask_ref[...].astype(jnp.float32)           # (TB, TS)

    acc_ref[...] += jnp.sum(tok * mask[:, :, None], axis=1)      # (TB, H)
    cnt_ref[...] += jnp.sum(mask, axis=1, keepdims=True)         # (TB, 1)

    @pl.when(s_idx == pl.num_programs(1) - 1)
    def _finalize():
        # Clamp applies to the *full-sequence* count, in float32 (1e-9 would
        # underflow to 0 in bf16 and per-tile clamping would be wrong).
        denom = jnp.maximum(cnt_ref[...], 1e-9)
        inv = pl.reciprocal(denom, approx=True)        # EUP slot, ~free
        out_ref[...] = (acc_ref[...] * inv).astype(out_ref.dtype)


def entity_pooling_pallas(token_embeddings,
                          pooling_mask,
                          *,
                          block_b=None,
                          block_s=None,
                          vmem_limit_bytes=None,
                          tok_tile_target_bytes=2 * 1024 * 1024):
    """Masked mean pool over the sequence dimension (Pallas TPU kernel)."""
    B, S, H = token_embeddings.shape
    if pooling_mask.shape != (B, S):
        raise ValueError(f"pooling_mask shape {pooling_mask.shape} != {(B, S)}")
    out_dtype = token_embeddings.dtype
    itemsize = jnp.dtype(token_embeddings.dtype).itemsize

    # Batch tile: full batch if small, else the sublane granule (8).
    if block_b is None:
        block_b = B if B <= 8 else 8
    tb = block_b

    # Sequence tile: full S if it fits the per-tile byte budget, otherwise the
    # largest multiple of 128 (mask lane granule) that does.
    if block_s is None:
        rows = max(1, tok_tile_target_bytes // max(1, tb * H * itemsize))
        block_s = S if rows >= S else max(128, (rows // 128) * 128)
    ts = block_s
    # TODO(synk): also tile H for very large hidden dims where a (tb, ts, H)
    # tile would exceed the per-generation VMEM budget.

    b_pad = pl.cdiv(B, tb) * tb
    s_pad = pl.cdiv(S, ts) * ts
    if b_pad != B or s_pad != S:
        # Zero padding: padded mask entries contribute nothing to the sum or
        # the count; padded batch rows are sliced off below.
        token_embeddings = jnp.pad(
            token_embeddings, ((0, b_pad - B), (0, s_pad - S), (0, 0)))
        pooling_mask = jnp.pad(pooling_mask, ((0, b_pad - B), (0, s_pad - S)))

    grid = (b_pad // tb, s_pad // ts)

    if vmem_limit_bytes is None:
        tok_tile = tb * ts * H * itemsize
        mask_tile = tb * ts * jnp.dtype(pooling_mask.dtype).itemsize
        out_tile = tb * H * itemsize
        scratch = tb * H * 4 + 8 * 128 * 4
        need = 2 * (tok_tile + mask_tile) + 2 * out_tile + scratch
        # Explicit budget: 2x headroom, clamped to a range that is safe on
        # v5e (16 MiB scoped default) through v7x (64 MiB physical).
        vmem_limit_bytes = int(min(max(2 * need, 16 * 1024 * 1024),
                                   48 * 1024 * 1024))

    out = pl.pallas_call(
        _entity_pool_kernel,
        out_shape=jax.ShapeDtypeStruct((b_pad, H), out_dtype),
        grid_spec=pltpu.PrefetchScalarGridSpec(
            num_scalar_prefetch=0,
            grid=grid,
            in_specs=[
                pl.BlockSpec((tb, ts, H), lambda b, s: (b, s, 0)),
                pl.BlockSpec((tb, ts), lambda b, s: (b, s)),
            ],
            # Same output block across the S axis -> resident accumulator.
            out_specs=pl.BlockSpec((tb, H), lambda b, s: (b, 0)),
            scratch_shapes=[
                pltpu.VMEM((tb, H), jnp.float32),   # masked-sum accumulator
                pltpu.VMEM((tb, 1), jnp.float32),   # mask-count accumulator
            ],
        ),
        compiler_params=pltpu.CompilerParams(
            dimension_semantics=("parallel", "arbitrary"),
            vmem_limit_bytes=vmem_limit_bytes,
        ),
    )(token_embeddings, pooling_mask)

    return out[:B] if b_pad != B else out


class EntityPooling:
    """JAX/Pallas port of the PyTorch EntityPooling module (no parameters)."""

    def __init__(self, word_embedding_dimension: int):
        self.word_embedding_dimension = word_embedding_dimension
        self.pooling_output_dimension = word_embedding_dimension
        self.config_keys = ['word_embedding_dimension']

    def get_pooling_mode_str(self) -> str:
        return 'entity'

    def get_config_dict(self):
        return {key: getattr(self, key) for key in self.config_keys}

    def get_sentence_embedding_dimension(self):
        return self.pooling_output_dimension

    def __call__(self, features: dict) -> dict:
        token_embeddings = features['token_embeddings']
        pooling_mask = features['pooling_mask']
        sentence_embedding = entity_pooling_pallas(token_embeddings,
                                                   pooling_mask)
        features = dict(features)
        features['sentence_embedding'] = sentence_embedding
        return features


def _reference(token_embeddings, pooling_mask):
    tok = token_embeddings.astype(jnp.float32)
    mask = pooling_mask.astype(jnp.float32)
    summed = (tok * mask[:, :, None]).sum(axis=1)
    denom = jnp.maximum(mask.sum(axis=1, keepdims=True), 1e-9)
    return (summed / denom).astype(token_embeddings.dtype)


if __name__ == "__main__":
    # Shapes implied by the module's forward: (batch, seq, hidden).
    B, S, H = 2, 8, 32

    key = jax.random.PRNGKey(0)
    k_tok, k_cls, k_mask = jax.random.split(key, 3)

    token_embeddings = jax.random.normal(k_tok, (B, S, H), dtype=jnp.float32)
    cls_token_embeddings = jax.random.normal(k_cls, (B, H), dtype=jnp.float32)
    attention_mask = jnp.ones((B, S), dtype=jnp.float32)
    pooling_mask = (jax.random.uniform(k_mask, (B, S)) > 0.5).astype(jnp.float32)

    features = {
        'token_embeddings': token_embeddings,
        'cls_token_embeddings': cls_token_embeddings,
        'attention_mask': attention_mask,
        'pooling_mask': pooling_mask,
    }

    module = EntityPooling(word_embedding_dimension=H)
    out_features = module(features)
    sent = jax.block_until_ready(out_features['sentence_embedding'])

    ref = _reference(token_embeddings, pooling_mask)
    assert sent.shape == (B, H)
    assert jnp.allclose(sent, ref, atol=1e-2, rtol=1e-2), \
        float(jnp.max(jnp.abs(sent - ref)))

    # Second check: exercises the (batch, seq) grid, the streamed S-axis
    # reduction, zero-padding of both axes, and the all-masked clamp path.
    B2, S2, H2 = 10, 300, 128
    k_tok2, k_mask2 = jax.random.split(jax.random.PRNGKey(1), 2)
    tok2 = jax.random.normal(k_tok2, (B2, S2, H2), dtype=jnp.float32)
    mask2 = (jax.random.uniform(k_mask2, (B2, S2)) > 0.5).astype(jnp.float32)
    mask2 = mask2.at[0].set(0.0)   # fully-masked row -> hits the 1e-9 clamp
    got2 = jax.block_until_ready(
        entity_pooling_pallas(tok2, mask2, block_b=8, block_s=128))
    ref2 = _reference(tok2, mask2)
    assert got2.shape == (B2, H2)
    assert jnp.allclose(got2, ref2, atol=1e-2, rtol=1e-2), \
        float(jnp.max(jnp.abs(got2 - ref2)))

    print("KERNEL_OK")
</pallas_src>

<mosaic_0001>
module attributes {stable_mosaic.version = 11 : i64} {
  func.func @_entity_pool_kernel(%arg0: i32, %arg1: i32, %arg2: memref<2x8x32xf32, #tpu.memory_space<vmem>>, %arg3: memref<2x8xf32, #tpu.memory_space<vmem>>, %arg4: memref<2x32xf32, #tpu.memory_space<vmem>>, %arg5: memref<2x32xf32, #tpu.memory_space<vmem>>, %arg6: memref<2x1xf32, #tpu.memory_space<vmem>>) attributes {dimension_semantics = [#tpu.dimension_semantics<parallel>, #tpu.dimension_semantics<arbitrary>], iteration_bounds = array<i64: 1, 1>, scalar_prefetch = 0 : i64, scratch_operands = 2 : i64, tpu.core_type = #tpu.core_type<tc>, window_params = [{transform_indices = @transform_0, window_bounds = array<i64: 2, 8, 32>}, {transform_indices = @transform_1, window_bounds = array<i64: 2, 8>}, {transform_indices = @transform_2, window_bounds = array<i64: 2, 32>}]} {
    %c0_i32 = arith.constant 0 : i32
    %0 = arith.cmpi eq, %arg1, %c0_i32 : i32
    %1 = arith.extui %0 : i1 to i32
    %c0_i32_0 = arith.constant 0 : i32
    %2 = arith.cmpi ne, %1, %c0_i32_0 : i32
    scf.if %2 {
      %cst_16 = arith.constant 0.000000e+00 : f32
      %20 = vector.broadcast %cst_16 : f32 to vector<2x32xf32>
      %c0_17 = arith.constant 0 : index
      %c0_18 = arith.constant 0 : index
      %21 = vector.load %arg5[%c0_17, %c0_18] : memref<2x32xf32, #tpu.memory_space<vmem>>, vector<2x32xf32>
      tpu.vector_store %arg5[%c0_17, %c0_18], %20 {strides = array<i32>} : memref<2x32xf32, #tpu.memory_space<vmem>>, vector<2x32xf32>,
      %cst_19 = arith.constant 0.000000e+00 : f32
      %22 = vector.broadcast %cst_19 : f32 to vector<2x1xf32>
      %c0_20 = arith.constant 0 : index
      %c0_21 = arith.constant 0 : index
      %23 = vector.load %arg6[%c0_20, %c0_21] : memref<2x1xf32, #tpu.memory_space<vmem>>, vector<2x1xf32>
      tpu.vector_store %arg6[%c0_20, %c0_21], %22 {strides = array<i32>} : memref<2x1xf32, #tpu.memory_space<vmem>>, vector<2x1xf32>,
    } else {
    }
    %c0 = arith.constant 0 : index
    %c0_1 = arith.constant 0 : index
    %c0_2 = arith.constant 0 : index
    %3 = vector.load %arg2[%c0, %c0_1, %c0_2] : memref<2x8x32xf32, #tpu.memory_space<vmem>>, vector<2x8x32xf32>
    %c0_3 = arith.constant 0 : index
    %c0_4 = arith.constant 0 : index
    %4 = vector.load %arg3[%c0_3, %c0_4] : memref<2x8xf32, #tpu.memory_space<vmem>>, vector<2x8xf32>
    %c0_5 = arith.constant 0 : index
    %c0_6 = arith.constant 0 : index
    %5 = vector.load %arg5[%c0_5, %c0_6] : memref<2x32xf32, #tpu.memory_space<vmem>>, vector<2x32xf32>
    %6 = vector.shape_cast %4 : vector<2x8xf32> to vector<2x8x1xf32>
    %7 = vector.broadcast %6 : vector<2x8x1xf32> to vector<2x8x32xf32>
    %8 = arith.mulf %3, %7 : vector<2x8x32xf32>
    %cst = arith.constant dense<0.000000e+00> : vector<2x32xf32>
    %9 = vector.multi_reduction <add>, %8, %cst [1] : vector<2x8x32xf32> to vector<2x32xf32>
    %10 = arith.addf %5, %9 : vector<2x32xf32>
    %c0_7 = arith.constant 0 : index
    %c0_8 = arith.constant 0 : index
    %11 = vector.load %arg5[%c0_7, %c0_8] : memref<2x32xf32, #tpu.memory_space<vmem>>, vector<2x32xf32>
    tpu.vector_store %arg5[%c0_7, %c0_8], %10 {strides = array<i32>} : memref<2x32xf32, #tpu.memory_space<vmem>>, vector<2x32xf32>,
    %c0_9 = arith.constant 0 : index
    %c0_10 = arith.constant 0 : index
    %12 = vector.load %arg6[%c0_9, %c0_10] : memref<2x1xf32, #tpu.memory_space<vmem>>, vector<2x1xf32>
    %cst_11 = arith.constant dense<0.000000e+00> : vector<2xf32>
    %13 = vector.multi_reduction <add>, %4, %cst_11 [1] : vector<2x8xf32> to vector<2xf32>
    %14 = vector.shape_cast %13 : vector<2xf32> to vector<2x1xf32>
    %15 = arith.addf %12, %14 : vector<2x1xf32>
    %c0_12 = arith.constant 0 : index
    %c0_13 = arith.constant 0 : index
    %16 = vector.load %arg6[%c0_12, %c0_13] : memref<2x1xf32, #tpu.memory_space<vmem>>, vector<2x1xf32>
    tpu.vector_store %arg6[%c0_12, %c0_13], %15 {strides = array<i32>} : memref<2x1xf32, #tpu.memory_space<vmem>>, vector<2x1xf32>,
    %c0_i32_14 = arith.constant 0 : i32
    %17 = arith.cmpi eq, %arg1, %c0_i32_14 : i32
    %18 = arith.extui %17 : i1 to i32
    %c0_i32_15 = arith.constant 0 : i32
    %19 = arith.cmpi ne, %18, %c0_i32_15 : i32
    scf.if %19 {
      %c0_16 = arith.constant 0 : index
      %c0_17 = arith.constant 0 : index
      %20 = vector.load %arg6[%c0_16, %c0_17] : memref<2x1xf32, #tpu.memory_space<vmem>>, vector<2x1xf32>
      %cst_18 = arith.constant 9.99999971E-10 : f32
      %21 = vector.broadcast %cst_18 : f32 to vector<2x1xf32>
      %22 = arith.maximumf %20, %21 : vector<2x1xf32>
      %23 = tpu.reciprocal %22 {approx = true} : vector<2x1xf32> -> vector<2x1xf32>
      %c0_19 = arith.constant 0 : index
      %c0_20 = arith.constant 0 : index
      %24 = vector.load %arg5[%c0_19, %c0_20] : memref<2x32xf32, #tpu.memory_space<vmem>>, vector<2x32xf32>
      %25 = vector.broadcast %23 : vector<2x1xf32> to vector<2x32xf32>
      %26 = arith.mulf %24, %25 : vector<2x32xf32>
      %c0_21 = arith.constant 0 : index
      %c0_22 = arith.constant 0 : index
      %27 = vector.load %arg4[%c0_21, %c0_22] : memref<2x32xf32, #tpu.memory_space<vmem>>, vector<2x32xf32>
      tpu.vector_store %arg4[%c0_21, %c0_22], %26 {strides = array<i32>} : memref<2x32xf32, #tpu.memory_space<vmem>>, vector<2x32xf32>,
    } else {
    }
    return
  }
  func.func @transform_0(%arg0: i32, %arg1: i32) -> (i32, i32, i32) {
    %c0_i32 = arith.constant 0 : i32
    %c0_i32_0 = arith.constant 0 : i32
    return %arg0, %arg1, %c0_i32 : i32, i32, i32
  }
  func.func @transform_1(%arg0: i32, %arg1: i32) -> (i32, i32) {
    %c0_i32 = arith.constant 0 : i32
    return %arg0, %arg1 : i32, i32
  }
  func.func @transform_2(%arg0: i32, %arg1: i32) -> (i32, i32) {
    %c0_i32 = arith.constant 0 : i32
    %c0_i32_0 = arith.constant 0 : i32
    return %arg0, %c0_i32 : i32, i32
  }
}

</mosaic_0001>

<llo_original>
// kernel: tpu_custom_call.1
$region0: #{tpu_custom_call.1}
  #allocation0 [shape = 'u32[]', space=smem, size = 0x4, offset = 0x4, fixed_abs, tag = 'smem constant byte address 0x4 - core index']
  #allocation1 [shape = 'u32[72,128]{1,0:T(1,128)}', space=vmem, size = 0x9000, scoped, tag = 'internal scratch']
  #allocation2 [shape = 'f32[2,32]{1,0:T(2,128)}', space=vmem, size = 0x400, scoped, tag = 'scratch operand']
  #allocation3 [shape = 'f32[2,1]{1,0:T(2,128)}', space=vmem, size = 0x400, scoped, tag = 'scratch operand']
  %s0 = inlined_call_operand.hbm [shape: f32[2,8,32], index: 0, kind: input, shape index: {}]
  %s1 = inlined_call_operand.hbm [shape: f32[2,8], index: 1, kind: input, shape index: {}]
  %s2 = inlined_call_operand.hbm [shape: f32[2,32], index: 2, kind: output, shape index: {}]
  %s3 = sld [smem:[#allocation0]]
  $region34: #{tpu_custom_call.1} parent=0
    _
  %s5 = ssub.s32 1, %s3
  %s6 = scalar_select 0, %s5, %s3
  $region1: #{tpu_custom_call.1} parent=0
    #allocation4 [shape = 'u8[8192]{0}', space=vmem, size = 0x2000, scoped, tag = 'input window, operand 0, single buffered']
    #allocation5 [shape = 's32[1]{0}', space=sflag, size = 0x4, scoped, tag = 'scoped memory for tpu_custom_call.1']
    #allocation6 [shape = 's32[1]{0}', space=sflag, size = 0x4, scoped, tag = 'scoped memory for tpu_custom_call.1']
    #allocation7 [shape = 'u8[1024]{0}', space=vmem, size = 0x400, scoped, tag = 'input window, operand 1, single buffered']
    #allocation8 [shape = 's32[1]{0}', space=sflag, size = 0x4, scoped, tag = 'scoped memory for tpu_custom_call.1']
    #allocation9 [shape = 'u8[1024]{0}', space=vmem, size = 0x400, scoped, tag = 'output window, operand 0, single buffered']
    %7 = vsyncpa [#allocation5], 0
    %8 = vsyncpa [#allocation8], 0
    %9 = vsyncpa [#allocation6], 0
    // Predicated region
    $region2: #{tpu_custom_call.1} parent=1 // pred_check
      _
    $region3: #{tpu_custom_call.1} parent=1 // pred_check_branch
      %11 = sbr.rel (0) target = $region5
    $region4: #{tpu_custom_call.1} parent=1 // pred_region
      %13 = vsyncadd [#allocation5], 0
      %s14 = sshll.u32 %s0, 4
      %s15 = int_to_ptr.hbm [resolvable:$true] %s14
      %s16 = sshll.u32 [#allocation4], 4
      %s17 = int_to_ptr.vmem [resolvable:$true] %s16
      %22 = dma.hbm_to_vmem [thread:$0]  %s15, 256, %s17, [#allocation5], 128, 128, 8
    $region5: #{tpu_custom_call.1} parent=1 // pred_fallthru
      _
    // Predicated region
    $region6: #{tpu_custom_call.1} parent=1 // pred_check
      _
    $region7: #{tpu_custom_call.1} parent=1 // pred_check_branch
      %24 = sbr.rel (0) target = $region9
    $region8: #{tpu_custom_call.1} parent=1 // pred_region
      %26 = vsyncadd [#allocation8], 0
      %s28 = sshll.u32 %s1, 4
      %s29 = int_to_ptr.hbm [resolvable:$true] %s28
      %s30 = sshll.u32 [#allocation7], 4
      %s31 = int_to_ptr.vmem [resolvable:$true] %s30
      %33 = dma.hbm_to_vmem [thread:$0]  %s29, 32, %s31, [#allocation8]
    $region9: #{tpu_custom_call.1} parent=1 // pred_fallthru
      _
    // Predicated region
    $region10: #{tpu_custom_call.1} parent=1 // pred_check
      _
    $region11: #{tpu_custom_call.1} parent=1 // pred_check_branch
      %35 = sbr.rel (0) target = $region13
    $region12: #{tpu_custom_call.1} parent=1 // pred_region
      %37 = dma.done [#allocation5], 256
    $region13: #{tpu_custom_call.1} parent=1 // pred_fallthru
      _
    // Predicated region
    $region14: #{tpu_custom_call.1} parent=1 // pred_check
      _
    $region15: #{tpu_custom_call.1} parent=1 // pred_check_branch
      %39 = sbr.rel (0) target = $region17
    $region16: #{tpu_custom_call.1} parent=1 // pred_region
      %41 = dma.done [#allocation8], 32
    $region17: #{tpu_custom_call.1} parent=1 // pred_fallthru
      _
    %p42 = scmp.eq.s32.totalorder 0, 0
    // Predicated region
    $region18: #{tpu_custom_call.1} parent=1 // pred_check
      %p43 = pneg %p42
    $region19: #{tpu_custom_call.1} parent=1 // pred_check_branch
      %45 = sbr.rel (%p43) target = $region21
    $region20: #{tpu_custom_call.1} parent=1 // pred_region
      %vm46 = vcmask 254976
      %47 = vst.msk [vmem:[#allocation2] sm:$0x3] %vm46, 0.0
      %vm48 = vcmask 1024
      %49 = vst.msk [vmem:[#allocation3] sm:$0x3] %vm48, 0.0
    $region21: #{tpu_custom_call.1} parent=1 // pred_fallthru
      _
    %v50 = vld [vmem:[#allocation4] sm:$0xff]
    %v51 = vld [vmem:[#allocation4 + $0x8] sm:$0xff]
    %v52 = vld [vmem:[#allocation7] sm:$0x3]
    %v53 = vld [vmem:[#allocation2] sm:$0x3]
    %v54 = vperm.slane %v52, 0
    %v55 = vlaneseq
    %v56 = vshrl.u32 %v55, 7
    %58 = vset.pattern.permute.xlu0 %v56
    %59 = vperm.xlu0 %58, %v54
    %v60 = vpop.permute.xlu0 %59
    %v61 = vperm.slane %v52, 1
    %v62 = vlaneseq
    %v63 = vshrl.u32 %v62, 7
    %65 = vset.pattern.permute.xlu0 %v63
    %66 = vperm.xlu0 %65, %v61
    %v67 = vpop.permute.xlu0 %66
    %v68 = vmul.f32 %v50, %v60
    %v69 = vmul.f32 %v51, %v67
    %vm70 = vcmask 261120
    %v71 = vsel %vm70, %v68, 0.0
    %v72 = vrot.slane %v71, 4
    %v73 = vadd.f32 %v71, %v72
    %v74 = vrot.slane %v73, 2
    %v75 = vadd.f32 %v73, %v74
    %v76 = vrot.slane %v75, 1
    %v77 = vadd.f32 %v75, %v76
    %v78 = vsel %vm70, %v69, 0.0
    %v79 = vrot.slane %v78, 4
    %v80 = vadd.f32 %v78, %v79
    %v81 = vrot.slane %v80, 2
    %v82 = vadd.f32 %v80, %v81
    %v83 = vrot.slane %v82, 1
    %v84 = vadd.f32 %v82, %v83
    %vm87 = vcmask 1041409
    %v88 = vsel %vm87, %v84, %v77
    %v90 = vadd.f32 %v53, %v88
    %vm91 = vcmask 254976
    %92 = vst.msk [vmem:[#allocation2] sm:$0x3] %vm91, %v90
    %v93 = vld [vmem:[#allocation3] sm:$0x3]
    %vm94 = vcmask 58368
    %v95 = vsel %vm94, %v52, 0.0
    %96 = vadd.xlane.f32.xlu0 %v95
    %v97 = vpop.xlane.xlu0 %96
    %v98 = vadd.f32 %v93, %v97
    %vm99 = vcmask 1024
    %100 = vst.msk [vmem:[#allocation3] sm:$0x3] %vm99, %v98
    // Predicated region
    $region22: #{tpu_custom_call.1} parent=1 // pred_check
      %p101 = pneg %p42
    $region23: #{tpu_custom_call.1} parent=1 // pred_check_branch
      %103 = sbr.rel (%p101) target = $region25
    $region24: #{tpu_custom_call.1} parent=1 // pred_region
      %v104 = vld [vmem:[#allocation3] sm:$0x3]
      %v105 = vmax.f32 %v104, 1e-09
      %v106 = vrcp.pop %v105
      %v107 = vld [vmem:[#allocation2] sm:$0x3]
      %109 = vset.pattern.permute.xlu0 0
      %110 = vperm.xlu0 %109, %v106
      %v111 = vpop.permute.xlu0 %110
      %v113 = vmul.f32 %v107, %v111
      %114 = vst.msk [vmem:[#allocation9] sm:$0x3] %vm91, %v113
    $region25: #{tpu_custom_call.1} parent=1 // pred_fallthru
      _
    // Predicated region
    $region26: #{tpu_custom_call.1} parent=1 // pred_check
      _
    $region27: #{tpu_custom_call.1} parent=1 // pred_check_branch
      %116 = sbr.rel (0) target = $region29
    $region28: #{tpu_custom_call.1} parent=1 // pred_region
      %118 = vsyncadd [#allocation6], 0
      %s120 = sshll.u32 [#allocation9], 4
      %s121 = int_to_ptr.vmem [resolvable:$true] %s120
      %s122 = sshll.u32 %s2, 4
      %s123 = int_to_ptr.hbm [resolvable:$true] %s122
      %125 = dma.vmem_to_hbm [thread:$0]  %s121, 32, %s123, [#allocation6]
    $region29: #{tpu_custom_call.1} parent=1 // pred_fallthru
      _
    // Predicated region
    $region30: #{tpu_custom_call.1} parent=1 // pred_check
      _
    $region31: #{tpu_custom_call.1} parent=1 // pred_check_branch
      %127 = sbr.rel (0) target = $region33
    $region32: #{tpu_custom_call.1} parent=1 // pred_region
      %129 = dma.done [#allocation6], 32
    $region33: #{tpu_custom_call.1} parent=1 // pred_fallthru
      _
    %130 = vsyncpa [#allocation5], 1
    %131 = vsyncpa [#allocation8], 1
    %132 = vsyncpa [#allocation6], 1

</llo_original>
